<compile_context>
chip_gen: v7x
topology: tpu7x:2x2x1
jax: 0.10.0
libtpu: 0.0.40
codegen_flags: <defaults>
</compile_context>

<pallas_src>
import functools

import jax
import jax.numpy as jnp
from jax.experimental import pallas as pl
from jax.experimental.pallas import tpu as pltpu


def _mlp_kernel(x_ref, w0_ref, b0_ref, w1_ref, b1_ref, w2_ref, b2_ref, o_ref):
    # Fused, transposed 3-layer MLP. All matmuls accumulate in f32 on the MXU;
    # bias add / ReLU stay in f32 (no bf16 VPU dependence, safe on v5e too).
    w_dtype = w0_ref.dtype
    x = x_ref[...]                                                     # (in,  tn)
    h = jnp.dot(w0_ref[...], x, preferred_element_type=jnp.float32)   # (hid, tn)
    h = jnp.maximum(h + b0_ref[...], 0.0).astype(w_dtype)
    h = jnp.dot(w1_ref[...], h, preferred_element_type=jnp.float32)   # (hid, tn)
    h = jnp.maximum(h + b1_ref[...], 0.0).astype(w_dtype)
    out = jnp.dot(w2_ref[...], h, preferred_element_type=jnp.float32) + b2_ref[...]
    o_ref[...] = out.astype(o_ref.dtype)                               # (out, tn)


def _round_up(a, b):
    return ((a + b - 1) // b) * b


def _cdiv(a, b):
    return -(-a // b)


def particle_predictor_forward(x, params, *, tile_n=16384, use_bf16=True):
    """x: (..., input_size). Returns (..., output_size) in x.dtype.

    params = (w0, b0, w1, b1, w2, b2) in PyTorch layout:
      w_i: (out_features, in_features), b_i: (out_features,)
    """
    w0, b0, w1, b1, w2, b2 = params
    in_size = x.shape[-1]
    hidden_size = w0.shape[0]
    out_size = w2.shape[0]
    s_x = x.shape

    stream_dtype = jnp.bfloat16 if use_bf16 else jnp.float32

    # Layout plumbing (single fused chain): flatten leading dims, cast the streaming
    # operand, pad N only to a lane multiple (128), put N on the lane axis.
    x2d = x.reshape(-1, in_size).astype(stream_dtype)    # (N, in_size)
    n = x2d.shape[0]
    n_pad = _round_up(n, 128)
    if n_pad != n:
        x2d = jnp.pad(x2d, ((0, n_pad - n), (0, 0)))
    x_t = x2d.T                                          # (in_size, n_pad)

    # Lane-aligned tile: round caller value to 128, clamp to n_pad, and ensure >=2
    # grid steps when N allows so both v7x TensorCores engage (no-op on v5e/v6e).
    tile_n = _round_up(max(128, int(tile_n)), 128)
    tile_n = min(tile_n, n_pad)
    if n_pad >= 256:
        tile_n = min(tile_n, _round_up(_cdiv(n_pad, 2), 128))
    grid_n = _cdiv(n_pad, tile_n)      # last tile may be partial -> masked by Pallas

    # Biases as (F, 1) f32 columns -> broadcast across the lane axis in-kernel.
    b0c = b0.reshape(hidden_size, 1).astype(jnp.float32)
    b1c = b1.reshape(hidden_size, 1).astype(jnp.float32)
    b2c = b2.reshape(out_size, 1).astype(jnp.float32)
    w0s, w1s, w2s = (w.astype(stream_dtype) for w in (w0, w1, w2))

    out_itemsize = jnp.dtype(stream_dtype).itemsize
    n_work = grid_n * tile_n
    flops = 2 * n_work * (in_size * hidden_size
                          + hidden_size * hidden_size
                          + hidden_size * out_size)
    bytes_accessed = (n_pad * in_size * out_itemsize               # x stream
                      + n_pad * out_size * out_itemsize            # output stream
                      + sum(int(w.size) * w.dtype.itemsize for w in (w0s, w1s, w2s))
                      + 4 * (2 * hidden_size + out_size))          # biases

    compiler_kwargs = dict(
        # Shards the batch-tile axis across the 2 TensorCores on v7x; no-op elsewhere.
        dimension_semantics=("parallel",),
    )
    if tile_n >= 32768:
        # Very large tiles: raise the scoped-VMEM limit (v5e default is only 16 MiB).
        compiler_kwargs["vmem_limit_bytes"] = 64 * 1024 * 1024

    out_t = pl.pallas_call(
        _mlp_kernel,
        out_shape=jax.ShapeDtypeStruct((out_size, n_pad), stream_dtype),
        grid_spec=pltpu.PrefetchScalarGridSpec(
            num_scalar_prefetch=0,
            grid=(grid_n,),
            in_specs=[
                pl.BlockSpec((in_size, tile_n), lambda i: (0, i)),           # x tile
                pl.BlockSpec((hidden_size, in_size), lambda i: (0, 0)),      # W0
                pl.BlockSpec((hidden_size, 1), lambda i: (0, 0)),            # b0
                pl.BlockSpec((hidden_size, hidden_size), lambda i: (0, 0)),  # W1
                pl.BlockSpec((hidden_size, 1), lambda i: (0, 0)),            # b1
                pl.BlockSpec((out_size, hidden_size), lambda i: (0, 0)),     # W2
                pl.BlockSpec((out_size, 1), lambda i: (0, 0)),               # b2
            ],
            out_specs=pl.BlockSpec((out_size, tile_n), lambda i: (0, i)),
        ),
        compiler_params=pltpu.CompilerParams(**compiler_kwargs),
        cost_estimate=pl.CostEstimate(
            flops=flops, transcendentals=0, bytes_accessed=bytes_accessed),
    )(x_t, w0s, b0c, w1s, b1c, w2s, b2c)

    out2d = out_t[:, :n].T                                # (N, out_size)
    return out2d.reshape(tuple(s_x[:-1]) + (out_size,)).astype(x.dtype)


def init_params(key, input_size, hidden_size, output_size):
    """PyTorch nn.Linear-style init: W (out, in), b (out,), uniform +-1/sqrt(fan_in)."""
    ks = jax.random.split(key, 6)

    def linear_init(kw, kb, fan_in, fan_out):
        bound = 1.0 / jnp.sqrt(fan_in)
        w = jax.random.uniform(kw, (fan_out, fan_in), jnp.float32, -bound, bound)
        b = jax.random.uniform(kb, (fan_out,), jnp.float32, -bound, bound)
        return w, b

    w0, b0 = linear_init(ks[0], ks[1], input_size, hidden_size)
    w1, b1 = linear_init(ks[2], ks[3], hidden_size, hidden_size)
    w2, b2 = linear_init(ks[4], ks[5], hidden_size, output_size)
    return (w0, b0, w1, b1, w2, b2)


if __name__ == "__main__":
    input_size, hidden_size, output_size = 8, 32, 3
    batch, n_particles = 2, 8  # x shape (batch, n_particles, input_size)

    key = jax.random.PRNGKey(0)
    k_x, k_p = jax.random.split(key)
    x = jax.random.normal(k_x, (batch, n_particles, input_size), jnp.float32)
    params = init_params(k_p, input_size, hidden_size, output_size)

    # Pure-JAX reference of the same math (PyTorch semantics: y = x @ W.T + b).
    w0, b0, w1, b1, w2, b2 = params
    x2d = x.reshape(-1, input_size)
    ref = jnp.maximum(x2d @ w0.T + b0, 0.0)
    ref = jnp.maximum(ref @ w1.T + b1, 0.0)
    ref = (ref @ w2.T + b2).reshape(batch, n_particles, output_size)

    # Default path: bf16 streaming (looser tolerance).
    fwd = jax.jit(functools.partial(particle_predictor_forward))
    out = jax.block_until_ready(fwd(x, params))
    assert out.shape == (batch, n_particles, output_size)
    assert jnp.allclose(out, ref, atol=5e-2, rtol=5e-2)

    # f32 path for exact-semantics check (tight tolerance).
    fwd_f32 = jax.jit(functools.partial(particle_predictor_forward, use_bf16=False))
    out_f32 = jax.block_until_ready(fwd_f32(x, params))
    assert jnp.allclose(out_f32, ref, atol=1e-5, rtol=1e-5)

    print("KERNEL_OK")
</pallas_src>

<mosaic_0001>
module attributes {stable_mosaic.version = 11 : i64} {
  func.func @_mlp_kernel(%arg0: i32, %arg1: memref<8x128xbf16, #tpu.memory_space<vmem>>, %arg2: memref<32x8xbf16, #tpu.memory_space<vmem>>, %arg3: memref<32x1xf32, #tpu.memory_space<vmem>>, %arg4: memref<32x32xbf16, #tpu.memory_space<vmem>>, %arg5: memref<32x1xf32, #tpu.memory_space<vmem>>, %arg6: memref<3x32xbf16, #tpu.memory_space<vmem>>, %arg7: memref<3x1xf32, #tpu.memory_space<vmem>>, %arg8: memref<3x128xbf16, #tpu.memory_space<vmem>>) attributes {dimension_semantics = [#tpu.dimension_semantics<parallel>], iteration_bounds = array<i64: 1>, scalar_prefetch = 0 : i64, scratch_operands = 0 : i64, tpu.core_type = #tpu.core_type<tc>, window_params = [{transform_indices = @transform_0, window_bounds = array<i64: 8, 128>}, {pipeline_mode = #tpu.pipeline_mode<synchronous>, transform_indices = @transform_1, window_bounds = array<i64: 32, 8>}, {pipeline_mode = #tpu.pipeline_mode<synchronous>, transform_indices = @transform_2, window_bounds = array<i64: 32, 1>}, {pipeline_mode = #tpu.pipeline_mode<synchronous>, transform_indices = @transform_3, window_bounds = array<i64: 32, 32>}, {pipeline_mode = #tpu.pipeline_mode<synchronous>, transform_indices = @transform_4, window_bounds = array<i64: 32, 1>}, {pipeline_mode = #tpu.pipeline_mode<synchronous>, transform_indices = @transform_5, window_bounds = array<i64: 3, 32>}, {pipeline_mode = #tpu.pipeline_mode<synchronous>, transform_indices = @transform_6, window_bounds = array<i64: 3, 1>}, {transform_indices = @transform_7, window_bounds = array<i64: 3, 128>}]} {
    %c0 = arith.constant 0 : index
    %c0_0 = arith.constant 0 : index
    %0 = vector.load %arg1[%c0, %c0_0] : memref<8x128xbf16, #tpu.memory_space<vmem>>, vector<8x128xbf16>
    %c0_1 = arith.constant 0 : index
    %c0_2 = arith.constant 0 : index
    %1 = vector.load %arg2[%c0_1, %c0_2] : memref<32x8xbf16, #tpu.memory_space<vmem>>, vector<32x8xbf16>
    %cst = arith.constant dense<0.000000e+00> : vector<32x128xf32>
    %2 = tpu.matmul %1, %0, %cst {dimension_numbers = #tpu.dot_dimension_numbers<[1], [0], [0], [1], [0, 0, 1, 1], [], []>} : vector<32x8xbf16>, vector<8x128xbf16>, vector<32x128xf32> -> vector<32x128xf32>
    %c0_3 = arith.constant 0 : index
    %c0_4 = arith.constant 0 : index
    %3 = vector.load %arg3[%c0_3, %c0_4] : memref<32x1xf32, #tpu.memory_space<vmem>>, vector<32x1xf32>
    %4 = vector.broadcast %3 : vector<32x1xf32> to vector<32x128xf32>
    %5 = arith.addf %2, %4 : vector<32x128xf32>
    %cst_5 = arith.constant 0.000000e+00 : f32
    %6 = vector.broadcast %cst_5 : f32 to vector<32x128xf32>
    %7 = arith.maximumf %5, %6 : vector<32x128xf32>
    %8 = arith.truncf %7 : vector<32x128xf32> to vector<32x128xbf16>
    %c0_6 = arith.constant 0 : index
    %c0_7 = arith.constant 0 : index
    %9 = vector.load %arg4[%c0_6, %c0_7] : memref<32x32xbf16, #tpu.memory_space<vmem>>, vector<32x32xbf16>
    %cst_8 = arith.constant dense<0.000000e+00> : vector<32x128xf32>
    %10 = tpu.matmul %9, %8, %cst_8 {dimension_numbers = #tpu.dot_dimension_numbers<[1], [0], [0], [1], [0, 0, 1, 1], [], []>} : vector<32x32xbf16>, vector<32x128xbf16>, vector<32x128xf32> -> vector<32x128xf32>
    %c0_9 = arith.constant 0 : index
    %c0_10 = arith.constant 0 : index
    %11 = vector.load %arg5[%c0_9, %c0_10] : memref<32x1xf32, #tpu.memory_space<vmem>>, vector<32x1xf32>
    %12 = vector.broadcast %11 : vector<32x1xf32> to vector<32x128xf32>
    %13 = arith.addf %10, %12 : vector<32x128xf32>
    %cst_11 = arith.constant 0.000000e+00 : f32
    %14 = vector.broadcast %cst_11 : f32 to vector<32x128xf32>
    %15 = arith.maximumf %13, %14 : vector<32x128xf32>
    %16 = arith.truncf %15 : vector<32x128xf32> to vector<32x128xbf16>
    %c0_12 = arith.constant 0 : index
    %c0_13 = arith.constant 0 : index
    %17 = vector.load %arg6[%c0_12, %c0_13] : memref<3x32xbf16, #tpu.memory_space<vmem>>, vector<3x32xbf16>
    %cst_14 = arith.constant dense<0.000000e+00> : vector<3x128xf32>
    %18 = tpu.matmul %17, %16, %cst_14 {dimension_numbers = #tpu.dot_dimension_numbers<[1], [0], [0], [1], [0, 0, 1, 1], [], []>} : vector<3x32xbf16>, vector<32x128xbf16>, vector<3x128xf32> -> vector<3x128xf32>
    %c0_15 = arith.constant 0 : index
    %c0_16 = arith.constant 0 : index
    %19 = vector.load %arg7[%c0_15, %c0_16] : memref<3x1xf32, #tpu.memory_space<vmem>>, vector<3x1xf32>
    %20 = vector.broadcast %19 : vector<3x1xf32> to vector<3x128xf32>
    %21 = arith.addf %18, %20 : vector<3x128xf32>
    %22 = arith.truncf %21 : vector<3x128xf32> to vector<3x128xbf16>
    %c0_17 = arith.constant 0 : index
    %c0_18 = arith.constant 0 : index
    %23 = vector.load %arg8[%c0_17, %c0_18] : memref<3x128xbf16, #tpu.memory_space<vmem>>, vector<3x128xbf16>
    tpu.vector_store %arg8[%c0_17, %c0_18], %22 {strides = array<i32>} : memref<3x128xbf16, #tpu.memory_space<vmem>>, vector<3x128xbf16>,
    return
  }
  func.func @transform_0(%arg0: i32) -> (i32, i32) {
    %c0_i32 = arith.constant 0 : i32
    %c0_i32_0 = arith.constant 0 : i32
    return %c0_i32, %arg0 : i32, i32
  }
  func.func @transform_1(%arg0: i32) -> (i32, i32) {
    %c0_i32 = arith.constant 0 : i32
    %c0_i32_0 = arith.constant 0 : i32
    %c0_i32_1 = arith.constant 0 : i32
    return %c0_i32, %c0_i32_0 : i32, i32
  }
  func.func @transform_2(%arg0: i32) -> (i32, i32) {
    %c0_i32 = arith.constant 0 : i32
    %c0_i32_0 = arith.constant 0 : i32
    %c0_i32_1 = arith.constant 0 : i32
    return %c0_i32, %c0_i32_0 : i32, i32
  }
  func.func @transform_3(%arg0: i32) -> (i32, i32) {
    %c0_i32 = arith.constant 0 : i32
    %c0_i32_0 = arith.constant 0 : i32
    %c0_i32_1 = arith.constant 0 : i32
    return %c0_i32, %c0_i32_0 : i32, i32
  }
  func.func @transform_4(%arg0: i32) -> (i32, i32) {
    %c0_i32 = arith.constant 0 : i32
    %c0_i32_0 = arith.constant 0 : i32
    %c0_i32_1 = arith.constant 0 : i32
    return %c0_i32, %c0_i32_0 : i32, i32
  }
  func.func @transform_5(%arg0: i32) -> (i32, i32) {
    %c0_i32 = arith.constant 0 : i32
    %c0_i32_0 = arith.constant 0 : i32
    %c0_i32_1 = arith.constant 0 : i32
    return %c0_i32, %c0_i32_0 : i32, i32
  }
  func.func @transform_6(%arg0: i32) -> (i32, i32) {
    %c0_i32 = arith.constant 0 : i32
    %c0_i32_0 = arith.constant 0 : i32
    %c0_i32_1 = arith.constant 0 : i32
    return %c0_i32, %c0_i32_0 : i32, i32
  }
  func.func @transform_7(%arg0: i32) -> (i32, i32) {
    %c0_i32 = arith.constant 0 : i32
    %c0_i32_0 = arith.constant 0 : i32
    return %c0_i32, %arg0 : i32, i32
  }
}

</mosaic_0001>

<llo_original>
// kernel: particle_predictor_forward.1
$region0: #{particle_predictor_forward.1}
  #allocation0 [shape = 'u32[]', space=smem, size = 0x4, offset = 0x4, fixed_abs, tag = 'smem constant byte address 0x4 - core index']
  #allocation1 [shape = 'u32[144,128]{1,0:T(1,128)}', space=vmem, size = 0x12000, scoped, tag = 'internal scratch']
  %s0 = inlined_call_operand.vmem [shape: bf16[8,128], index: 0, kind: input, shape index: {}]
  %s1 = inlined_call_operand.vmem [shape: bf16[32,8], index: 1, kind: input, shape index: {}]
  %s2 = inlined_call_operand.vmem [shape: f32[32,1], index: 2, kind: input, shape index: {}]
  %s3 = inlined_call_operand.vmem [shape: bf16[32,32], index: 3, kind: input, shape index: {}]
  %s4 = inlined_call_operand.vmem [shape: f32[32,1], index: 4, kind: input, shape index: {}]
  %s5 = inlined_call_operand.vmem [shape: bf16[3,32], index: 5, kind: input, shape index: {}]
  %s6 = inlined_call_operand.vmem [shape: f32[3,1], index: 6, kind: input, shape index: {}]
  %s7 = inlined_call_operand.vmem [shape: bf16[3,128], index: 7, kind: output, shape index: {}]
  %s8 = sld [smem:[#allocation0]]
  $region38: #{particle_predictor_forward.1} parent=0
    _
  %s10 = ssub.s32 1, %s8
  %s11 = scalar_select 0, %s10, %s8
  // Predicated region
  $region2: #{particle_predictor_forward.1} parent=0 // pred_check
    _
  $region3: #{particle_predictor_forward.1} parent=0 // pred_check_branch
    %13 = sbr.rel (0) target = $region5
  $region4: #{particle_predictor_forward.1} parent=0 // pred_region
    _
  $region5: #{particle_predictor_forward.1} parent=0 // pred_fallthru
    _
  // Predicated region
  $region6: #{particle_predictor_forward.1} parent=0 // pred_check
    _
  $region7: #{particle_predictor_forward.1} parent=0 // pred_check_branch
    %15 = sbr.rel (0) target = $region9
  $region8: #{particle_predictor_forward.1} parent=0 // pred_region
    _
  $region9: #{particle_predictor_forward.1} parent=0 // pred_fallthru
    _
  // Predicated region
  $region10: #{particle_predictor_forward.1} parent=0 // pred_check
    _
  $region11: #{particle_predictor_forward.1} parent=0 // pred_check_branch
    %17 = sbr.rel (0) target = $region13
  $region12: #{particle_predictor_forward.1} parent=0 // pred_region
    _
  $region13: #{particle_predictor_forward.1} parent=0 // pred_fallthru
    _
  // Predicated region
  $region14: #{particle_predictor_forward.1} parent=0 // pred_check
    _
  $region15: #{particle_predictor_forward.1} parent=0 // pred_check_branch
    %19 = sbr.rel (0) target = $region17
  $region16: #{particle_predictor_forward.1} parent=0 // pred_region
    _
  $region17: #{particle_predictor_forward.1} parent=0 // pred_fallthru
    _
  // Predicated region
  $region18: #{particle_predictor_forward.1} parent=0 // pred_check
    _
  $region19: #{particle_predictor_forward.1} parent=0 // pred_check_branch
    %21 = sbr.rel (0) target = $region21
  $region20: #{particle_predictor_forward.1} parent=0 // pred_region
    _
  $region21: #{particle_predictor_forward.1} parent=0 // pred_fallthru
    _
  // Predicated region
  $region22: #{particle_predictor_forward.1} parent=0 // pred_check
    _
  $region23: #{particle_predictor_forward.1} parent=0 // pred_check_branch
    %23 = sbr.rel (0) target = $region25
  $region24: #{particle_predictor_forward.1} parent=0 // pred_region
    _
  $region25: #{particle_predictor_forward.1} parent=0 // pred_fallthru
    _
  // Predicated region
  $region26: #{particle_predictor_forward.1} parent=0 // pred_check
    _
  $region27: #{particle_predictor_forward.1} parent=0 // pred_check_branch
    %25 = sbr.rel (0) target = $region29
  $region28: #{particle_predictor_forward.1} parent=0 // pred_region
    _
  $region29: #{particle_predictor_forward.1} parent=0 // pred_fallthru
    _
  %v27 = vld [vmem:[%s0] sm:$0xf]
  %v28 = vld [vmem:[%s1] sm:$0xf]
  %v29 = vld [vmem:[%s1 + $0x4] sm:$0xf]
  %v30 = vld [vmem:[%s1 + $0x8] sm:$0xf]
  %v31 = vld [vmem:[%s1 + $0xc] sm:$0xf]
  %v32 = vld [vmem:[%s2] sm:$0xff]
  %v33 = vld [vmem:[%s2 + $0x8] sm:$0xff]
  %v34 = vld [vmem:[%s2 + $0x10] sm:$0xff]
  %v35 = vld [vmem:[%s2 + $0x18] sm:$0xff]
  %37 = vset.pattern.permute.xlu0 0
  %38 = vperm.xlu0 %37, %v32
  %v39 = vpop.permute.xlu0 %38
  %42 = vset.pattern.permute.xlu0 0
  %43 = vperm.xlu0 %42, %v33
  %v44 = vpop.permute.xlu0 %43
  %47 = vset.pattern.permute.xlu0 0
  %48 = vperm.xlu0 %47, %v34
  %v49 = vpop.permute.xlu0 %48
  %52 = vset.pattern.permute.xlu0 0
  %53 = vperm.xlu0 %52, %v35
  %v54 = vpop.permute.xlu0 %53
  %v60 = vunpack.c.l.b16 %v28
  %v61 = vunpack.c.l.b16 %v29
  %v62 = vunpack.c.l.b16 %v30
  %v63 = vunpack.c.l.b16 %v31
  %v64 = vpack.c.b16 %v61, %v60
  %v65 = vpack.c.b16 %v63, %v62
  %vm66 = vcmask 64512
  %v68 = vsel %vm66, %v64, 0
  %v71 = vsel %vm66, %v65, 0
  %vm73 = vcmask 1043456
  %v75 = vsel %vm73, %v27, 0
  %77 = vmatprep.subr.bf16.mxu0 0
  %78 = vmatpush1.bf16.msra.mxu0 %v75
  %79 = vmatprep.subr.bf16.mxu0 0
  %80 = vmatpush1.bf16.msra.mxu0 0
  %81 = vmatprep.subr.bf16.mxu0 0
  %82 = vmatpush1.bf16.msra.mxu0 0
  %83 = vmatprep.subr.bf16.mxu0 0
  %84 = vmatpush1.bf16.msra.mxu0 0
  %85 = vmatprep.subr.bf16.mxu0 0
  %86 = vmatpush1.bf16.msra.mxu0 0
  %87 = vmatprep.subr.bf16.mxu0 0
  %88 = vmatpush1.bf16.msra.mxu0 0
  %89 = vmatprep.subr.bf16.mxu0 0
  %90 = vmatpush1.bf16.msra.mxu0 0
  %91 = vmatprep.subr.bf16.mxu0 0
  %92 = vmatpush1.bf16.msra.mxu0 0
  %93 = vmatprep.subr.bf16.mxu0 0
  %94 = vmatpush1.bf16.msra.mxu0 0
  %95 = vmatprep.subr.bf16.mxu0 0
  %96 = vmatpush1.bf16.msra.mxu0 0
  %97 = vmatprep.subr.bf16.mxu0 0
  %98 = vmatpush1.bf16.msra.mxu0 0
  %99 = vmatprep.subr.bf16.mxu0 0
  %100 = vmatpush1.bf16.msra.mxu0 0
  %101 = vmatprep.subr.bf16.mxu0 0
  %102 = vmatpush1.bf16.msra.mxu0 0
  %103 = vmatprep.subr.bf16.mxu0 0
  %104 = vmatpush1.bf16.msra.mxu0 0
  %105 = vmatprep.subr.bf16.mxu0 0
  %106 = vmatpush1.bf16.msra.mxu0 0
  %107 = vmatprep.subr.bf16.mxu0 0
  %108 = vmatpush1.bf16.msra.mxu0 0
  %109 = vmatprep.mubr.bf16.mxu0 0
  %110 = vmatmul.mubr.bf16.gmra.mrb[0].mxu0 %v68
  %v111 = vpop.f32.mrb[0].mxu0
  %v112 = vadd.f32 %v39, %v111
  %v113 = vpop.f32.mrb[0].mxu0
  %v114 = vpop.f32.mrb[0].mxu0
  %v115 = vadd.f32 %v44, %v114
  %v116 = vpop.f32.mrb[0].mxu0
  %117 = vmatprep.mubr.bf16.mxu0 0
  %118 = vmatmul.mubr.bf16.gmra.mrb[0].mxu0 %v71
  %v119 = vpop.f32.mrb[0].mxu0
  %v120 = vadd.f32 %v49, %v119
  %v121 = vpop.f32.mrb[0].mxu0
  %v122 = vpop.f32.mrb[0].mxu0
  %v123 = vadd.f32 %v54, %v122
  %v124 = vpop.f32.mrb[0].mxu0
  %125 = vdwg.mxu0
  %v126 = vmax.f32 %v112, 0.0
  %v127 = vmax.f32 %v115, 0.0
  %v128 = vmax.f32 %v120, 0.0
  %v129 = vmax.f32 %v123, 0.0
  %v130 = vpack.c.bf16 %v127, %v126
  %v131 = vpack.c.bf16 %v129, %v128
  %v132 = vld [vmem:[%s3] sm:$0xf]
  %v133 = vld [vmem:[%s3 + $0x4] sm:$0xf]
  %v134 = vld [vmem:[%s3 + $0x8] sm:$0xf]
  %v135 = vld [vmem:[%s3 + $0xc] sm:$0xf]
  %v136 = vld [vmem:[%s4] sm:$0xff]
  %v137 = vld [vmem:[%s4 + $0x8] sm:$0xff]
  %v138 = vld [vmem:[%s4 + $0x10] sm:$0xff]
  %v139 = vld [vmem:[%s4 + $0x18] sm:$0xff]
  %141 = vset.pattern.permute.xlu0 0
  %142 = vperm.xlu0 %141, %v136
  %v143 = vpop.permute.xlu0 %142
  %146 = vset.pattern.permute.xlu0 0
  %147 = vperm.xlu0 %146, %v137
  %v148 = vpop.permute.xlu0 %147
  %151 = vset.pattern.permute.xlu0 0
  %152 = vperm.xlu0 %151, %v138
  %v153 = vpop.permute.xlu0 %152
  %156 = vset.pattern.permute.xlu0 0
  %157 = vperm.xlu0 %156, %v139
  %v158 = vpop.permute.xlu0 %157
  %v164 = vunpack.c.l.b16 %v132
  %v165 = vunpack.c.l.b16 %v133
  %v166 = vunpack.c.l.b16 %v134
  %v167 = vunpack.c.l.b16 %v135
  %v168 = vpack.c.b16 %v165, %v164
  %v169 = vpack.c.b16 %v167, %v166
  %vm170 = vcmask 261120
  %v172 = vsel %vm170, %v168, 0
  %v175 = vsel %vm170, %v169, 0
  %177 = vmatprep.subr.bf16.mxu0 0
  %178 = vmatpush1.bf16.msra.mxu0 %v130
  %179 = vmatprep.subr.bf16.mxu0 0
  %180 = vmatpush1.bf16.msra.mxu0 %v131
  %181 = vmatprep.subr.bf16.mxu0 0
  %182 = vmatpush1.bf16.msra.mxu0 0
  %183 = vmatprep.subr.bf16.mxu0 0
  %184 = vmatpush1.bf16.msra.mxu0 0
  %185 = vmatprep.subr.bf16.mxu0 0
  %186 = vmatpush1.bf16.msra.mxu0 0
  %187 = vmatprep.subr.bf16.mxu0 0
  %188 = vmatpush1.bf16.msra.mxu0 0
  %189 = vmatprep.subr.bf16.mxu0 0
  %190 = vmatpush1.bf16.msra.mxu0 0
  %191 = vmatprep.subr.bf16.mxu0 0
  %192 = vmatpush1.bf16.msra.mxu0 0
  %193 = vmatprep.subr.bf16.mxu0 0
  %194 = vmatpush1.bf16.msra.mxu0 0
  %195 = vmatprep.subr.bf16.mxu0 0
  %196 = vmatpush1.bf16.msra.mxu0 0
  %197 = vmatprep.subr.bf16.mxu0 0
  %198 = vmatpush1.bf16.msra.mxu0 0
  %199 = vmatprep.subr.bf16.mxu0 0
  %200 = vmatpush1.bf16.msra.mxu0 0
  %201 = vmatprep.subr.bf16.mxu0 0
  %202 = vmatpush1.bf16.msra.mxu0 0
  %203 = vmatprep.subr.bf16.mxu0 0
  %204 = vmatpush1.bf16.msra.mxu0 0
  %205 = vmatprep.subr.bf16.mxu0 0
  %206 = vmatpush1.bf16.msra.mxu0 0
  %207 = vmatprep.subr.bf16.mxu0 0
  %208 = vmatpush1.bf16.msra.mxu0 0
  %209 = vmatprep.mubr.bf16.mxu0 0
  %210 = vmatmul.mubr.bf16.gmra.mrb[0].mxu0 %v172
  %v211 = vpop.f32.mrb[0].mxu0
  %v212 = vadd.f32 %v143, %v211
  %v213 = vpop.f32.mrb[0].mxu0
  %v214 = vpop.f32.mrb[0].mxu0
  %v215 = vadd.f32 %v148, %v214
  %v216 = vpop.f32.mrb[0].mxu0
  %217 = vmatprep.mubr.bf16.mxu0 0
  %218 = vmatmul.mubr.bf16.gmra.mrb[0].mxu0 %v175
  %v219 = vpop.f32.mrb[0].mxu0
  %v220 = vadd.f32 %v153, %v219
  %v221 = vpop.f32.mrb[0].mxu0
  %v222 = vpop.f32.mrb[0].mxu0
  %v223 = vadd.f32 %v158, %v222
  %v224 = vpop.f32.mrb[0].mxu0
  %225 = vdwg.mxu0
  %v226 = vmax.f32 %v212, 0.0
  %v227 = vmax.f32 %v215, 0.0
  %v228 = vmax.f32 %v220, 0.0
  %v229 = vmax.f32 %v223, 0.0
  %v230 = vpack.c.bf16 %v227, %v226
  %v231 = vpack.c.bf16 %v229, %v228
  %v232 = vld [vmem:[%s5] sm:$0x3]
  %v233 = vld [vmem:[%s6] sm:$0x7]
  %235 = vset.pattern.permute.xlu0 0
  %236 = vperm.xlu0 %235, %v233
  %v237 = vpop.permute.xlu0 %236
  %v240 = vsel %vm170, %v232, 0
  %242 = vmatprep.subr.bf16.mxu0 0
  %243 = vmatpush1.bf16.msra.mxu0 %v230
  %244 = vmatprep.subr.bf16.mxu0 0
  %245 = vmatpush1.bf16.msra.mxu0 %v231
  %246 = vmatprep.subr.bf16.mxu0 0
  %247 = vmatpush1.bf16.msra.mxu0 0
  %248 = vmatprep.subr.bf16.mxu0 0
  %249 = vmatpush1.bf16.msra.mxu0 0
  %250 = vmatprep.subr.bf16.mxu0 0
  %251 = vmatpush1.bf16.msra.mxu0 0
  %252 = vmatprep.subr.bf16.mxu0 0
  %253 = vmatpush1.bf16.msra.mxu0 0
  %254 = vmatprep.subr.bf16.mxu0 0
  %255 = vmatpush1.bf16.msra.mxu0 0
  %256 = vmatprep.subr.bf16.mxu0 0
  %257 = vmatpush1.bf16.msra.mxu0 0
  %258 = vmatprep.subr.bf16.mxu0 0
  %259 = vmatpush1.bf16.msra.mxu0 0
  %260 = vmatprep.subr.bf16.mxu0 0
  %261 = vmatpush1.bf16.msra.mxu0 0
  %262 = vmatprep.subr.bf16.mxu0 0
  %263 = vmatpush1.bf16.msra.mxu0 0
  %264 = vmatprep.subr.bf16.mxu0 0
  %265 = vmatpush1.bf16.msra.mxu0 0
  %266 = vmatprep.subr.bf16.mxu0 0
  %267 = vmatpush1.bf16.msra.mxu0 0
  %268 = vmatprep.subr.bf16.mxu0 0
  %269 = vmatpush1.bf16.msra.mxu0 0
  %270 = vmatprep.subr.bf16.mxu0 0
  %271 = vmatpush1.bf16.msra.mxu0 0
  %272 = vmatprep.subr.bf16.mxu0 0
  %273 = vmatpush1.bf16.msra.mxu0 0
  %274 = vmatprep.mubr.bf16.mxu0 0
  %275 = vmatmul.mubr.bf16.gmra.mrb[0].mxu0 %v240
  %v276 = vpop.f32.mrb[0].mxu0
  %v277 = vadd.f32 %v237, %v276
  %v278 = vpop.f32.mrb[0].mxu0
  %v279 = vpop.f32.mrb[0].mxu0
  %v280 = vpop.f32.mrb[0].mxu0
  %281 = vdwg.mxu0
  %v282 = vpack.c.bf16 %v277, %v277
  %vm283 = vcmask 1041408
  %vm284 = vsmask.f32 1280
  %vm285 = vmand %vm283, %vm284
  %v286 = vld [vmem:[%s7] sm:$0x3]
  %v287 = vsel %vm285, %v282, %v286
  %288 = vst [vmem:[%s7] sm:$0x3] %v287
  // Predicated region
  $region30: #{particle_predictor_forward.1} parent=0 // pred_check
    _
  $region31: #{particle_predictor_forward.1} parent=0 // pred_check_branch
    %290 = sbr.rel (0) target = $region33
  $region32: #{particle_predictor_forward.1} parent=0 // pred_region
    _
  $region33: #{particle_predictor_forward.1} parent=0 // pred_fallthru
    _
  // Predicated region
  $region34: #{particle_predictor_forward.1} parent=0 // pred_check
    _
  $region35: #{particle_predictor_forward.1} parent=0 // pred_check_branch
    %292 = sbr.rel (0) target = $region37
  $region36: #{particle_predictor_forward.1} parent=0 // pred_region
    _
  $region37: #{particle_predictor_forward.1} parent=0 // pred_fallthru
    _

</llo_original>
